<compile_context>
chip_gen: v7x
topology: tpu7x:2x2x1
jax: 0.10.0
libtpu: 0.0.40
codegen_flags: <defaults>
</compile_context>

<pallas_src>
import functools

import jax
import jax.numpy as jnp
from jax import lax
from jax.experimental import pallas as pl
from jax.experimental.pallas import tpu as pltpu

_LANE = 128                      # hidden (64) and class dims zero-padded to one lane width
_EPS = 1e-5                      # nn.BatchNorm1d default
_TILE_VMEM_BUDGET = 20 << 20     # double-buffered tile bytes per call (all TPU gens)
_FUSED_BYTES_LIMIT = 8 << 20     # single-call fused path below this footprint


def _round_up(n, m):
    return (n + m - 1) // m * m


def _pad2d(a, rows, cols, dtype=None):
    if a.ndim == 1:
        a = a.reshape(1, -1)
    r, c = a.shape
    a = jnp.pad(a, ((0, rows - r), (0, cols - c)))
    return a if dtype is None else a.astype(dtype)


def _vmem_limit(buffer_bytes):
    # Explicit scoped-VMEM limit: footprint + headroom, clamped to stay well
    # inside v7x's 64 MiB physical VMEM (and v5e's smaller default).
    return int(min(max(buffer_bytes + (4 << 20), 16 << 20), 56 << 20))


# ---------------------------------------------------------------------------
# Fused single-call path (whole problem resident in VMEM, x read exactly once)
# ---------------------------------------------------------------------------
def _fused_kernel(x_ref, w1_ref, b1_ref, gamma_ref, beta_ref, w2_ref, b2_ref,
                  o_ref, *, apply_bn, eps, mm_dtype):
    h = jnp.dot(x_ref[...].astype(mm_dtype), w1_ref[...],
                preferred_element_type=jnp.float32)
    if apply_bn:
        # b1 cancels exactly in (h - mean): skip it on the BN path.
        mean = jnp.mean(h, axis=0, keepdims=True)
        var = jnp.mean(jnp.square(h - mean), axis=0, keepdims=True)  # centered
        scale = gamma_ref[...] * lax.rsqrt(var + eps)
        shift = beta_ref[...] - mean * scale
    else:
        scale = jnp.ones_like(b1_ref[...])
        shift = b1_ref[...]
    h = jnp.maximum(h * scale + shift, 0.0)
    # Dropout(p=0.2): identity in eval mode (see TODO at top of file).
    y = jnp.dot(h.astype(w2_ref.dtype), w2_ref[...],
                preferred_element_type=jnp.float32)
    o_ref[...] = (y + b2_ref[...]).astype(o_ref.dtype)


# ---------------------------------------------------------------------------
# Two-pass path, pass 1: per-column sum / sum-of-squares of h = x @ W1.
# Grid = (split, tiles_per): outer axis "parallel" (per-split partial
# accumulators -> both v7x TensorCores), inner axis "arbitrary" (reduction).
# Optionally also materializes h so pass 2 can skip x and the first matmul.
# ---------------------------------------------------------------------------
def _stats_kernel(x_ref, w1_ref, sum_ref, sumsq_ref, *h_out, mm_dtype):
    @pl.when(pl.program_id(1) == 0)
    def _():
        sum_ref[...] = jnp.zeros_like(sum_ref)
        sumsq_ref[...] = jnp.zeros_like(sumsq_ref)

    h = jnp.dot(x_ref[...].astype(mm_dtype), w1_ref[...],
                preferred_element_type=jnp.float32)
    # Accumulate into row 0 of the (8, 128) partial block (rows 1..7 stay 0).
    sum_ref[0:1, :] += jnp.sum(h, axis=0, keepdims=True)
    sumsq_ref[0:1, :] += jnp.sum(h * h, axis=0, keepdims=True)
    if h_out:
        h_out[0][...] = h.astype(h_out[0].dtype)


# ---------------------------------------------------------------------------
# Two-pass path, pass 2: affine (BN scale/shift precomputed in JAX, or
# scale=1/shift=b1 when BN is skipped), ReLU, output layer.
# ---------------------------------------------------------------------------
def _apply_from_h_kernel(h_ref, scale_ref, shift_ref, w2_ref, b2_ref, o_ref):
    h = h_ref[...].astype(jnp.float32)
    h = jnp.maximum(h * scale_ref[...] + shift_ref[...], 0.0)
    y = jnp.dot(h.astype(w2_ref.dtype), w2_ref[...],
                preferred_element_type=jnp.float32)
    o_ref[...] = (y + b2_ref[...]).astype(o_ref.dtype)


def _apply_from_x_kernel(x_ref, w1_ref, scale_ref, shift_ref, w2_ref, b2_ref,
                         o_ref, *, mm_dtype):
    h = jnp.dot(x_ref[...].astype(mm_dtype), w1_ref[...],
                preferred_element_type=jnp.float32)
    h = jnp.maximum(h * scale_ref[...] + shift_ref[...], 0.0)
    y = jnp.dot(h.astype(w2_ref.dtype), w2_ref[...],
                preferred_element_type=jnp.float32)
    o_ref[...] = (y + b2_ref[...]).astype(o_ref.dtype)


def multiclass_classification_forward(x, params, *,
                                      matmul_dtype=jnp.float32,
                                      out_dtype=jnp.float32,
                                      batch_tile=None,
                                      fused=None):
    """x: [B, num_feature]. Returns logits [B, num_class] in out_dtype.

    matmul_dtype=jnp.bfloat16 is an opt-in perf path; the float32 default
    matches the PyTorch module's numerics.
    """
    w1, b1, gamma, beta, w2, b2 = params
    B, F = x.shape
    C = w2.shape[1]
    H = CP = _LANE
    mm_isz = jnp.dtype(matmul_dtype).itemsize
    x_isz = jnp.dtype(x.dtype).itemsize
    out_isz = jnp.dtype(out_dtype).itemsize
    apply_bn = B > 1

    # Lane-pad the (tiny) parameters; zero padding keeps padded lanes exactly 0.
    w1p = _pad2d(w1, F, H, matmul_dtype)
    w2p = _pad2d(w2, H, CP, matmul_dtype)
    b1p = _pad2d(b1, 1, H, jnp.float32)
    gammap = _pad2d(gamma, 1, H, jnp.float32)
    betap = _pad2d(beta, 1, H, jnp.float32)
    b2p = _pad2d(b2, 1, CP, jnp.float32)

    weight_bytes = (F * H + H * CP) * mm_isz + 4 * H * 4

    # ----------------------- fused single-call fast path ---------------------
    fused_bytes = B * F * x_isz + 3 * B * H * 4 + weight_bytes
    if fused is None:
        fused = fused_bytes <= _FUSED_BYTES_LIMIT
    if fused:
        out = pl.pallas_call(
            functools.partial(_fused_kernel, apply_bn=apply_bn, eps=_EPS,
                              mm_dtype=matmul_dtype),
            out_shape=jax.ShapeDtypeStruct((B, CP), out_dtype),
            compiler_params=pltpu.CompilerParams(
                vmem_limit_bytes=_vmem_limit(2 * fused_bytes)),
            cost_estimate=pl.CostEstimate(
                flops=2 * B * (F * H + H * CP),
                transcendentals=H if apply_bn else 0,
                bytes_accessed=B * F * x_isz + B * CP * out_isz + weight_bytes),
        )(x, w1p, b1p, gammap, betap, w2p, b2p)
        return out[:, :C]

    # ----------------------------- two-pass path ------------------------------
    # Materialize h in pass 1 only when cheaper than re-streaming x (and
    # redoing the first matmul) in pass 2.
    materialize_h = apply_bn and (F * x_isz > 2 * H * mm_isz)
    h_isz = mm_isz

    # Adaptive batch tile: largest multiple of 8 whose double-buffered tiles
    # for the heavier pass stay inside a fixed VMEM budget.
    x_row = 2 * F * x_isz
    h_row = 2 * H * h_isz
    o_row = 2 * CP * out_isz
    per_row = max(x_row + (h_row if materialize_h else 0),
                  (h_row if materialize_h else x_row) + o_row)
    tb = max(8, min((_TILE_VMEM_BUDGET // per_row) // 8 * 8, 8192))
    if batch_tile is not None:
        tb = max(8, min(tb, _round_up(batch_tile, 8)))
    n_tiles = max(1, -(-B // tb))
    tb = _round_up(-(-B // n_tiles), 8)          # minimize ragged padding
    b_pad = n_tiles * tb
    split = 2 if (apply_bn and n_tiles >= 2 and n_tiles % 2 == 0) else 1
    tiles_per = n_tiles // split

    # Only pad the handful of ragged batch rows (no dtype cast, no full copy
    # when tb divides B); zero rows contribute nothing to the statistics.
    xp = x if b_pad == B else jnp.pad(x, ((0, b_pad - B), (0, 0)))

    if apply_bn:
        stats_out_shape = [jax.ShapeDtypeStruct((split * 8, H), jnp.float32),
                           jax.ShapeDtypeStruct((split * 8, H), jnp.float32)]
        stats_out_specs = [pl.BlockSpec((8, H), lambda c, i: (c, 0)),
                           pl.BlockSpec((8, H), lambda c, i: (c, 0))]
        if materialize_h:
            stats_out_shape.append(jax.ShapeDtypeStruct((b_pad, H), matmul_dtype))
            stats_out_specs.append(
                pl.BlockSpec((tb, H), lambda c, i: (c * tiles_per + i, 0)))

        p1_buf = (2 * tb * F * x_isz
                  + (2 * tb * H * h_isz if materialize_h else 0)
                  + 4 * 8 * H * 4 + 2 * F * H * mm_isz)
        stats_out = pl.pallas_call(
            functools.partial(_stats_kernel, mm_dtype=matmul_dtype),
            out_shape=tuple(stats_out_shape),
            grid=(split, tiles_per),
            in_specs=[pl.BlockSpec((tb, F), lambda c, i: (c * tiles_per + i, 0)),
                      pl.BlockSpec((F, H), lambda c, i: (0, 0))],
            out_specs=tuple(stats_out_specs),
            compiler_params=pltpu.CompilerParams(
                dimension_semantics=("parallel", "arbitrary"),
                vmem_limit_bytes=_vmem_limit(p1_buf)),
            cost_estimate=pl.CostEstimate(
                flops=2 * b_pad * F * H, transcendentals=0,
                bytes_accessed=(b_pad * F * x_isz + F * H * mm_isz
                                + (b_pad * H * h_isz if materialize_h else 0))),
        )(xp, w1p)
        if materialize_h:
            part_sum, part_sumsq, h_mat = stats_out
        else:
            part_sum, part_sumsq = stats_out
            h_mat = None

        # BatchNorm affine, computed once (loop-invariant) in plain JAX.
        # TODO(synk): E[h^2]-E[h]^2 can lose f32 precision when |mean| >> std.
        mean = jnp.sum(part_sum, axis=0, keepdims=True) / B
        var = jnp.maximum(jnp.sum(part_sumsq, axis=0, keepdims=True) / B
                          - mean * mean, 0.0)
        scale = gammap * lax.rsqrt(var + _EPS)
        shift = betap - mean * scale              # b1 cancels on the BN path
    else:
        h_mat = None
        scale = jnp.ones((1, H), jnp.float32)
        shift = b1p

    out_shape = jax.ShapeDtypeStruct((b_pad, CP), out_dtype)
    out_spec = pl.BlockSpec((tb, CP), lambda i: (i, 0))
    vec_h = pl.BlockSpec((1, H), lambda i: (0, 0))
    vec_c = pl.BlockSpec((1, CP), lambda i: (0, 0))

    if h_mat is not None:
        p2_buf = (2 * tb * H * h_isz + 2 * tb * CP * out_isz
                  + 2 * H * CP * mm_isz)
        out = pl.pallas_call(
            _apply_from_h_kernel,
            out_shape=out_shape,
            grid=(n_tiles,),
            in_specs=[pl.BlockSpec((tb, H), lambda i: (i, 0)),
                      vec_h, vec_h,
                      pl.BlockSpec((H, CP), lambda i: (0, 0)),
                      vec_c],
            out_specs=out_spec,
            compiler_params=pltpu.CompilerParams(
                dimension_semantics=("parallel",),
                vmem_limit_bytes=_vmem_limit(p2_buf)),
            cost_estimate=pl.CostEstimate(
                flops=2 * b_pad * H * CP, transcendentals=0,
                bytes_accessed=(b_pad * H * h_isz + b_pad * CP * out_isz
                                + H * CP * mm_isz)),
        )(h_mat, scale, shift, w2p, b2p)
    else:
        p2_buf = (2 * tb * F * x_isz + 2 * tb * CP * out_isz
                  + 2 * (F * H + H * CP) * mm_isz)
        out = pl.pallas_call(
            functools.partial(_apply_from_x_kernel, mm_dtype=matmul_dtype),
            out_shape=out_shape,
            grid=(n_tiles,),
            in_specs=[pl.BlockSpec((tb, F), lambda i: (i, 0)),
                      pl.BlockSpec((F, H), lambda i: (0, 0)),
                      vec_h, vec_h,
                      pl.BlockSpec((H, CP), lambda i: (0, 0)),
                      vec_c],
            out_specs=out_spec,
            compiler_params=pltpu.CompilerParams(
                dimension_semantics=("parallel",),
                vmem_limit_bytes=_vmem_limit(p2_buf)),
            cost_estimate=pl.CostEstimate(
                flops=2 * b_pad * (F * H + H * CP), transcendentals=0,
                bytes_accessed=(b_pad * F * x_isz + b_pad * CP * out_isz
                                + (F * H + H * CP) * mm_isz)),
        )(xp, w1p, scale, shift, w2p, b2p)

    # Tiny (B*C element) slice back to the logical logits shape.
    return out[:B, :C]


def init_params(key, num_feature, num_class, hidden=64):
    """Deterministic init mimicking PyTorch nn.Linear default (U[-1/sqrt(fan_in), +])."""
    k1, k2, k3, k4 = jax.random.split(key, 4)
    bound1 = 1.0 / jnp.sqrt(num_feature)
    w1 = jax.random.uniform(k1, (num_feature, hidden), jnp.float32, -bound1, bound1)
    b1 = jax.random.uniform(k2, (1, hidden), jnp.float32, -bound1, bound1)
    gamma = jnp.ones((1, hidden), jnp.float32)   # BatchNorm1d weight
    beta = jnp.zeros((1, hidden), jnp.float32)   # BatchNorm1d bias
    bound2 = 1.0 / jnp.sqrt(hidden)
    w2 = jax.random.uniform(k3, (hidden, num_class), jnp.float32, -bound2, bound2)
    b2 = jax.random.uniform(k4, (1, num_class), jnp.float32, -bound2, bound2)
    return (w1, b1, gamma, beta, w2, b2)


def _reference_forward(x, params, matmul_dtype=jnp.float32):
    """Pure-JAX reference (same matmul input dtype as the kernel under test)."""
    w1, b1, gamma, beta, w2, b2 = params
    h = jnp.dot(x.astype(matmul_dtype), w1.astype(matmul_dtype),
                preferred_element_type=jnp.float32) + b1
    if x.shape[0] > 1:
        mean = jnp.mean(h, axis=0, keepdims=True)
        var = jnp.mean((h - mean) ** 2, axis=0, keepdims=True)
        h = (h - mean) / jnp.sqrt(var + _EPS) * gamma + beta
    h = jnp.maximum(h, 0.0)
    return jnp.dot(h.astype(matmul_dtype), w2.astype(matmul_dtype),
                   preferred_element_type=jnp.float32) + b2


if __name__ == "__main__":
    B, NUM_FEATURE, NUM_CLASS = 8, 32, 5

    root = jax.random.PRNGKey(0)
    kx, kp, kx3, kp4, kx4 = jax.random.split(root, 5)
    x = jax.random.normal(kx, (B, NUM_FEATURE), dtype=jnp.float32)
    params = init_params(kp, NUM_FEATURE, NUM_CLASS)
    ref = _reference_forward(x, params)

    # 1. Fused single-call fast path (auto-selected at this size), f32.
    out = jax.block_until_ready(multiclass_classification_forward(x, params))
    assert out.shape == (B, NUM_CLASS)
    assert jnp.allclose(out, ref, atol=2e-4, rtol=2e-4)

    # 2. Two-pass tiled path (forced), f32.
    out2 = jax.block_until_ready(
        multiclass_classification_forward(x, params, fused=False))
    assert jnp.allclose(out2, ref, atol=5e-4, rtol=5e-4)

    # 3. Two-pass path with multiple batch tiles + split (2-core) stats partials.
    B3 = 64
    x3 = jax.random.normal(kx3, (B3, NUM_FEATURE), dtype=jnp.float32)
    out3 = jax.block_until_ready(
        multiclass_classification_forward(x3, params, fused=False, batch_tile=16))
    assert jnp.allclose(out3, _reference_forward(x3, params), atol=5e-4, rtol=5e-4)

    # 4. Two-pass path with materialized h (larger F triggers the gate), f32.
    B4, F4 = 32, 384
    params4 = init_params(kp4, F4, NUM_CLASS)
    x4 = jax.random.normal(kx4, (B4, F4), dtype=jnp.float32)
    out4 = jax.block_until_ready(
        multiclass_classification_forward(x4, params4, fused=False))
    assert jnp.allclose(out4, _reference_forward(x4, params4), atol=1e-3, rtol=1e-3)

    # 5. bf16 matmul inputs (explicit opt-in perf path).
    out5 = jax.block_until_ready(
        multiclass_classification_forward(x, params, matmul_dtype=jnp.bfloat16))
    assert jnp.allclose(out5, _reference_forward(x, params, jnp.bfloat16),
                        atol=1e-2, rtol=1e-2)
    assert jnp.allclose(out5, ref, atol=5e-2, rtol=5e-2)

    # 6. B == 1: BatchNorm skipped (matches `if x.shape[0] > 1`).
    out6 = jax.block_until_ready(multiclass_classification_forward(x[:1], params))
    assert jnp.allclose(out6, _reference_forward(x[:1], params), atol=2e-4, rtol=2e-4)

    print("KERNEL_OK")
</pallas_src>

<mosaic_0001>
module attributes {stable_mosaic.version = 11 : i64} {
  func.func @_fused_kernel(%arg0: memref<8x32xf32, #tpu.memory_space<vmem>>, %arg1: memref<32x128xf32, #tpu.memory_space<vmem>>, %arg2: memref<1x128xf32, #tpu.memory_space<vmem>>, %arg3: memref<1x128xf32, #tpu.memory_space<vmem>>, %arg4: memref<1x128xf32, #tpu.memory_space<vmem>>, %arg5: memref<128x128xf32, #tpu.memory_space<vmem>>, %arg6: memref<1x128xf32, #tpu.memory_space<vmem>>, %arg7: memref<8x128xf32, #tpu.memory_space<vmem>>) attributes {dimension_semantics = [], scalar_prefetch = 0 : i64, scratch_operands = 0 : i64, tpu.core_type = #tpu.core_type<tc>} {
    %c0 = arith.constant 0 : index
    %c0_0 = arith.constant 0 : index
    %0 = vector.load %arg0[%c0, %c0_0] : memref<8x32xf32, #tpu.memory_space<vmem>>, vector<8x32xf32>
    %c0_1 = arith.constant 0 : index
    %c0_2 = arith.constant 0 : index
    %1 = vector.load %arg1[%c0_1, %c0_2] : memref<32x128xf32, #tpu.memory_space<vmem>>, vector<32x128xf32>
    %cst = arith.constant dense<0.000000e+00> : vector<8x128xf32>
    %2 = tpu.matmul %0, %1, %cst {dimension_numbers = #tpu.dot_dimension_numbers<[1], [0], [0], [1], [0, 0, 1, 1], [], []>} : vector<8x32xf32>, vector<32x128xf32>, vector<8x128xf32> -> vector<8x128xf32>
    %cst_3 = arith.constant dense<0.000000e+00> : vector<128xf32>
    %3 = vector.multi_reduction <add>, %2, %cst_3 [0] : vector<8x128xf32> to vector<128xf32>
    %4 = vector.shape_cast %3 : vector<128xf32> to vector<1x128xf32>
    %cst_4 = arith.constant 8.000000e+00 : f32
    %5 = vector.broadcast %cst_4 : f32 to vector<1x128xf32>
    %6 = arith.divf %4, %5 : vector<1x128xf32>
    %7 = vector.broadcast %6 : vector<1x128xf32> to vector<8x128xf32>
    %8 = arith.subf %2, %7 : vector<8x128xf32>
    %9 = arith.mulf %8, %8 : vector<8x128xf32>
    %cst_5 = arith.constant dense<0.000000e+00> : vector<128xf32>
    %10 = vector.multi_reduction <add>, %9, %cst_5 [0] : vector<8x128xf32> to vector<128xf32>
    %11 = vector.shape_cast %10 : vector<128xf32> to vector<1x128xf32>
    %cst_6 = arith.constant 8.000000e+00 : f32
    %12 = vector.broadcast %cst_6 : f32 to vector<1x128xf32>
    %13 = arith.divf %11, %12 : vector<1x128xf32>
    %c0_7 = arith.constant 0 : index
    %c0_8 = arith.constant 0 : index
    %14 = vector.load %arg3[%c0_7, %c0_8] : memref<1x128xf32, #tpu.memory_space<vmem>>, vector<1x128xf32>
    %cst_9 = arith.constant 9.99999974E-6 : f32
    %15 = vector.broadcast %cst_9 : f32 to vector<1x128xf32>
    %16 = arith.addf %13, %15 : vector<1x128xf32>
    %17 = math.rsqrt %16 : vector<1x128xf32>
    %18 = arith.mulf %14, %17 : vector<1x128xf32>
    %c0_10 = arith.constant 0 : index
    %c0_11 = arith.constant 0 : index
    %19 = vector.load %arg4[%c0_10, %c0_11] : memref<1x128xf32, #tpu.memory_space<vmem>>, vector<1x128xf32>
    %20 = arith.mulf %6, %18 : vector<1x128xf32>
    %21 = arith.subf %19, %20 : vector<1x128xf32>
    %22 = vector.broadcast %18 : vector<1x128xf32> to vector<8x128xf32>
    %23 = arith.mulf %2, %22 : vector<8x128xf32>
    %24 = vector.broadcast %21 : vector<1x128xf32> to vector<8x128xf32>
    %25 = arith.addf %23, %24 : vector<8x128xf32>
    %cst_12 = arith.constant 0.000000e+00 : f32
    %26 = vector.broadcast %cst_12 : f32 to vector<8x128xf32>
    %27 = arith.maximumf %25, %26 : vector<8x128xf32>
    %c0_13 = arith.constant 0 : index
    %c0_14 = arith.constant 0 : index
    %28 = vector.load %arg5[%c0_13, %c0_14] : memref<128x128xf32, #tpu.memory_space<vmem>>, vector<128x128xf32>
    %cst_15 = arith.constant dense<0.000000e+00> : vector<8x128xf32>
    %29 = tpu.matmul %27, %28, %cst_15 {dimension_numbers = #tpu.dot_dimension_numbers<[1], [0], [0], [1], [0, 0, 1, 1], [], []>} : vector<8x128xf32>, vector<128x128xf32>, vector<8x128xf32> -> vector<8x128xf32>
    %c0_16 = arith.constant 0 : index
    %c0_17 = arith.constant 0 : index
    %30 = vector.load %arg6[%c0_16, %c0_17] : memref<1x128xf32, #tpu.memory_space<vmem>>, vector<1x128xf32>
    %31 = vector.broadcast %30 : vector<1x128xf32> to vector<8x128xf32>
    %32 = arith.addf %29, %31 : vector<8x128xf32>
    %c0_18 = arith.constant 0 : index
    %c0_19 = arith.constant 0 : index
    %33 = vector.load %arg7[%c0_18, %c0_19] : memref<8x128xf32, #tpu.memory_space<vmem>>, vector<8x128xf32>
    tpu.vector_store %arg7[%c0_18, %c0_19], %32 {strides = array<i32>} : memref<8x128xf32, #tpu.memory_space<vmem>>, vector<8x128xf32>,
    return
  }
}

</mosaic_0001>

<llo_original>
// kernel: tpu_custom_call.1
$region0: #{tpu_custom_call.1}
  #allocation0 [shape = 'u32[]', space=smem, size = 0x4, offset = 0x4, fixed_abs, tag = 'smem constant byte address 0x4 - core index']
  #allocation1 [shape = 'u32[144,128]{1,0:T(1,128)}', space=vmem, size = 0x12000, scoped, tag = 'internal scratch']
  %s0 = inlined_call_operand.hbm [shape: f32[8,32], index: 0, kind: input, shape index: {}]
  %s1 = inlined_call_operand.hbm [shape: f32[32,128], index: 1, kind: input, shape index: {}]
  %s2 = inlined_call_operand.vmem [shape: f32[1,128], index: 2, kind: input, shape index: {}]
  %s3 = inlined_call_operand.vmem [shape: f32[1,128], index: 3, kind: input, shape index: {}]
  %s4 = inlined_call_operand.vmem [shape: f32[1,128], index: 4, kind: input, shape index: {}]
  %s5 = inlined_call_operand.hbm [shape: f32[128,128], index: 5, kind: input, shape index: {}]
  %s6 = inlined_call_operand.vmem [shape: f32[1,128], index: 6, kind: input, shape index: {}]
  %s7 = inlined_call_operand.hbm [shape: f32[8,128], index: 7, kind: output, shape index: {}]
  %s8 = sld [smem:[#allocation0]]
  $region50: #{tpu_custom_call.1} parent=0
    _
  %s10 = ssub.s32 1, %s8
  %s11 = scalar_select 0, %s10, %s8
  $region1: #{tpu_custom_call.1} parent=0
    #allocation2 [shape = 'u8[4096]{0}', space=vmem, size = 0x1000, scoped, tag = 'input window, operand 0, single buffered']
    #allocation3 [shape = 's32[1]{0}', space=sflag, size = 0x4, scoped, tag = 'scoped memory for tpu_custom_call.1']
    #allocation4 [shape = 's32[1]{0}', space=sflag, size = 0x4, scoped, tag = 'scoped memory for tpu_custom_call.1']
    #allocation5 [shape = 'u8[16384]{0}', space=vmem, size = 0x4000, scoped, tag = 'input window, operand 1, single buffered']
    #allocation6 [shape = 's32[1]{0}', space=sflag, size = 0x4, scoped, tag = 'scoped memory for tpu_custom_call.1']
    #allocation7 [shape = 'u8[65536]{0}', space=vmem, size = 0x10000, scoped, tag = 'input window, operand 5, single buffered']
    #allocation8 [shape = 'u8[4096]{0}', space=vmem, size = 0x1000, scoped, tag = 'output window, operand 0, single buffered']
    %12 = vsyncpa [#allocation3], 0
    %13 = vsyncpa [#allocation6], 0
    %14 = vsyncpa [#allocation4], 0
    // Predicated region
    $region2: #{tpu_custom_call.1} parent=1 // pred_check
      _
    $region3: #{tpu_custom_call.1} parent=1 // pred_check_branch
      %16 = sbr.rel (0) target = $region5
    $region4: #{tpu_custom_call.1} parent=1 // pred_region
      %s18 = ssub.s32 128, 128
      %19 = vsyncadd [#allocation3], %s18
      %s21 = sshll.u32 [#allocation2], 4
      %s22 = int_to_ptr.vmem [resolvable:$true] %s21
      %24 = dma.hbm_to_vmem [thread:$0]  %s0, 128, %s22, [#allocation3]
    $region5: #{tpu_custom_call.1} parent=1 // pred_fallthru
      _
    // Predicated region
    $region6: #{tpu_custom_call.1} parent=1 // pred_check
      _
    $region7: #{tpu_custom_call.1} parent=1 // pred_check_branch
      %26 = sbr.rel (0) target = $region9
    $region8: #{tpu_custom_call.1} parent=1 // pred_region
      %s28 = ssub.s32 512, 512
      %29 = vsyncadd [#allocation6], %s28
      %s30 = sshll.u32 [#allocation5], 4
      %s31 = int_to_ptr.vmem [resolvable:$true] %s30
      %36 = dma.hbm_to_vmem [thread:$0]  %s1, 512, %s31, [#allocation6], 128, 128, 8
    $region9: #{tpu_custom_call.1} parent=1 // pred_fallthru
      _
    // Predicated region
    $region10: #{tpu_custom_call.1} parent=1 // pred_check
      _
    $region11: #{tpu_custom_call.1} parent=1 // pred_check_branch
      %38 = sbr.rel (0) target = $region13
    $region12: #{tpu_custom_call.1} parent=1 // pred_region
      _
    $region13: #{tpu_custom_call.1} parent=1 // pred_fallthru
      _
    // Predicated region
    $region14: #{tpu_custom_call.1} parent=1 // pred_check
      _
    $region15: #{tpu_custom_call.1} parent=1 // pred_check_branch
      %40 = sbr.rel (0) target = $region17
    $region16: #{tpu_custom_call.1} parent=1 // pred_region
      _
    $region17: #{tpu_custom_call.1} parent=1 // pred_fallthru
      _
    // Predicated region
    $region18: #{tpu_custom_call.1} parent=1 // pred_check
      _
    $region19: #{tpu_custom_call.1} parent=1 // pred_check_branch
      %42 = sbr.rel (0) target = $region21
    $region20: #{tpu_custom_call.1} parent=1 // pred_region
      _
    $region21: #{tpu_custom_call.1} parent=1 // pred_fallthru
      _
    // Predicated region
    $region22: #{tpu_custom_call.1} parent=1 // pred_check
      _
    $region23: #{tpu_custom_call.1} parent=1 // pred_check_branch
      %44 = sbr.rel (0) target = $region25
    $region24: #{tpu_custom_call.1} parent=1 // pred_region
      %s46 = ssub.s32 2048, 2048
      %47 = vsyncadd [#allocation6], %s46
      %s48 = sshll.u32 [#allocation7], 4
      %s49 = int_to_ptr.vmem [resolvable:$true] %s48
      %54 = dma.hbm_to_vmem [thread:$0]  %s5, 2048, %s49, [#allocation6], 128, 128, 8
    $region25: #{tpu_custom_call.1} parent=1 // pred_fallthru
      _
    // Predicated region
    $region26: #{tpu_custom_call.1} parent=1 // pred_check
      _
    $region27: #{tpu_custom_call.1} parent=1 // pred_check_branch
      %56 = sbr.rel (0) target = $region29
    $region28: #{tpu_custom_call.1} parent=1 // pred_region
      _
    $region29: #{tpu_custom_call.1} parent=1 // pred_fallthru
      _
    // Predicated region
    $region30: #{tpu_custom_call.1} parent=1 // pred_check
      _
    $region31: #{tpu_custom_call.1} parent=1 // pred_check_branch
      %58 = sbr.rel (0) target = $region33
    $region32: #{tpu_custom_call.1} parent=1 // pred_region
      %59 = dma.done [#allocation3], 128
    $region33: #{tpu_custom_call.1} parent=1 // pred_fallthru
      _
    // Predicated region
    $region34: #{tpu_custom_call.1} parent=1 // pred_check
      _
    $region35: #{tpu_custom_call.1} parent=1 // pred_check_branch
      %61 = sbr.rel (0) target = $region37
    $region36: #{tpu_custom_call.1} parent=1 // pred_region
      %62 = dma.done [#allocation6], 512
    $region37: #{tpu_custom_call.1} parent=1 // pred_fallthru
      _
    // Predicated region
    $region38: #{tpu_custom_call.1} parent=1 // pred_check
      _
    $region39: #{tpu_custom_call.1} parent=1 // pred_check_branch
      %64 = sbr.rel (0) target = $region41
    $region40: #{tpu_custom_call.1} parent=1 // pred_region
      %65 = dma.done [#allocation6], 2048
    $region41: #{tpu_custom_call.1} parent=1 // pred_fallthru
      _
    %v66 = vld [vmem:[#allocation2] sm:$0xff]
    %v67 = vld [vmem:[#allocation5] sm:$0xff]
    %v68 = vld [vmem:[#allocation5 + $0x8] sm:$0xff]
    %v69 = vld [vmem:[#allocation5 + $0x10] sm:$0xff]
    %v70 = vld [vmem:[#allocation5 + $0x18] sm:$0xff]
    %vm71 = vcmask 261120
    %v73 = vsel %vm71, %v66, 0
    %75 = vmatprep.subr.mxu0 0.0
    %76 = vmatpush1.msra.mxu0 %v67
    %77 = vmatprep.subr.mxu0 0.0
    %78 = vmatpush1.msra.mxu0 %v68
    %79 = vmatprep.subr.mxu0 0.0
    %80 = vmatpush1.msra.mxu0 %v69
    %81 = vmatprep.subr.mxu0 0.0
    %82 = vmatpush1.msra.mxu0 %v70
    %83 = vmatprep.subr.mxu0 0.0
    %84 = vmatpush1.msra.mxu0 0.0
    %85 = vmatprep.subr.mxu0 0.0
    %86 = vmatpush1.msra.mxu0 0.0
    %87 = vmatprep.subr.mxu0 0.0
    %88 = vmatpush1.msra.mxu0 0.0
    %89 = vmatprep.subr.mxu0 0.0
    %90 = vmatpush1.msra.mxu0 0.0
    %91 = vmatprep.subr.mxu0 0.0
    %92 = vmatpush1.msra.mxu0 0.0
    %93 = vmatprep.subr.mxu0 0.0
    %94 = vmatpush1.msra.mxu0 0.0
    %95 = vmatprep.subr.mxu0 0.0
    %96 = vmatpush1.msra.mxu0 0.0
    %97 = vmatprep.subr.mxu0 0.0
    %98 = vmatpush1.msra.mxu0 0.0
    %99 = vmatprep.subr.mxu0 0.0
    %100 = vmatpush1.msra.mxu0 0.0
    %101 = vmatprep.subr.mxu0 0.0
    %102 = vmatpush1.msra.mxu0 0.0
    %103 = vmatprep.subr.mxu0 0.0
    %104 = vmatpush1.msra.mxu0 0.0
    %105 = vmatprep.subr.mxu0 0.0
    %106 = vmatpush1.msra.mxu0 0.0
    %107 = vmatprep.subr.mxu0 0.0
    %108 = vmatpush1.msra.mxu0 0.0
    %109 = vmatprep.subr.mxu0 0.0
    %110 = vmatpush1.msra.mxu0 0.0
    %111 = vmatprep.subr.mxu0 0.0
    %112 = vmatpush1.msra.mxu0 0.0
    %113 = vmatprep.subr.mxu0 0.0
    %114 = vmatpush1.msra.mxu0 0.0
    %115 = vmatprep.subr.mxu0 0.0
    %116 = vmatpush1.msra.mxu0 0.0
    %117 = vmatprep.subr.mxu0 0.0
    %118 = vmatpush1.msra.mxu0 0.0
    %119 = vmatprep.subr.mxu0 0.0
    %120 = vmatpush1.msra.mxu0 0.0
    %121 = vmatprep.subr.mxu0 0.0
    %122 = vmatpush1.msra.mxu0 0.0
    %123 = vmatprep.subr.mxu0 0.0
    %124 = vmatpush1.msra.mxu0 0.0
    %125 = vmatprep.subr.mxu0 0.0
    %126 = vmatpush1.msra.mxu0 0.0
    %127 = vmatprep.subr.mxu0 0.0
    %128 = vmatpush1.msra.mxu0 0.0
    %129 = vmatprep.subr.mxu0 0.0
    %130 = vmatpush1.msra.mxu0 0.0
    %131 = vmatprep.subr.mxu0 0.0
    %132 = vmatpush1.msra.mxu0 0.0
    %133 = vmatprep.subr.mxu0 0.0
    %134 = vmatpush1.msra.mxu0 0.0
    %135 = vmatprep.subr.mxu0 0.0
    %136 = vmatpush1.msra.mxu0 0.0
    %137 = vmatprep.subr.mxu0 0.0
    %138 = vmatpush1.msra.mxu0 0.0
    %139 = vmatprep.mubr.f32.mxu0 0.0
    %140 = vmatmul.mubr.f32.gmra.mrb[0].mxu0 %v73
    %v141 = vpop.f32.mrb[0].mxu0
    %v142 = vadd.f32 0.0, %v141
    %v143 = vpop.f32.mrb[0].mxu0
    %144 = vdwg.mxu0
    %v145 = vrot.slane %v142, 4
    %v146 = vadd.f32 %v142, %v145
    %v147 = vrot.slane %v146, 2
    %v148 = vadd.f32 %v146, %v147
    %v149 = vrot.slane %v148, 1
    %v150 = vadd.f32 %v148, %v149
    %v151 = vrcp.pop 8.0
    %v152 = vmul.f32 %v150, %v151
    %v153 = vsub.f32 %v142, %v152
    %v154 = vmul.f32 %v153, %v153
    %v155 = vrot.slane %v154, 4
    %v156 = vadd.f32 %v154, %v155
    %v157 = vrot.slane %v156, 2
    %v158 = vadd.f32 %v156, %v157
    %v159 = vrot.slane %v158, 1
    %v160 = vadd.f32 %v158, %v159
    %v161 = vmul.f32 %v160, %v151
    %v162 = vld [vmem:[%s3] sm:$0x1]
    %v163 = vadd.f32 %v161, 1e-05
    %v164 = vrsqrt.pop %v163
    %v165 = vmul.f32 %v162, %v164
    %v166 = vld [vmem:[%s4] sm:$0x1]
    %v167 = vmul.f32 %v152, %v165
    %v168 = vsub.f32 %v166, %v167
    %v170 = vlaneseq
    %v171 = vshrl.u32 %v170, 7
    %v172 = vsub.s32 0, %v171
    %v173 = vrot.slane %v165, %v172
    %v175 = vmul.f32 %v142, %v173
    %v177 = vlaneseq
    %v178 = vshrl.u32 %v177, 7
    %v179 = vsub.s32 0, %v178
    %v180 = vrot.slane %v168, %v179
    %v182 = vadd.f32 %v175, %v180
    %v183 = vmax.f32 %v182, 0.0
    %v184 = vld [vmem:[#allocation7] sm:$0xff]
    %v185 = vld [vmem:[#allocation7 + $0x8] sm:$0xff]
    %v186 = vld [vmem:[#allocation7 + $0x10] sm:$0xff]
    %v187 = vld [vmem:[#allocation7 + $0x18] sm:$0xff]
    %v188 = vld [vmem:[#allocation7 + $0x20] sm:$0xff]
    %v189 = vld [vmem:[#allocation7 + $0x28] sm:$0xff]
    %v190 = vld [vmem:[#allocation7 + $0x30] sm:$0xff]
    %v191 = vld [vmem:[#allocation7 + $0x38] sm:$0xff]
    %v192 = vld [vmem:[#allocation7 + $0x40] sm:$0xff]
    %v193 = vld [vmem:[#allocation7 + $0x48] sm:$0xff]
    %v194 = vld [vmem:[#allocation7 + $0x50] sm:$0xff]
    %v195 = vld [vmem:[#allocation7 + $0x58] sm:$0xff]
    %v196 = vld [vmem:[#allocation7 + $0x60] sm:$0xff]
    %v197 = vld [vmem:[#allocation7 + $0x68] sm:$0xff]
    %v198 = vld [vmem:[#allocation7 + $0x70] sm:$0xff]
    %v199 = vld [vmem:[#allocation7 + $0x78] sm:$0xff]
    %v200 = vld [vmem:[%s6] sm:$0x1]
    %v202 = vlaneseq
    %v203 = vshrl.u32 %v202, 7
    %v204 = vsub.s32 0, %v203
    %v205 = vrot.slane %v200, %v204
    %207 = vmatprep.subr.mxu0 0.0
    %208 = vmatpush1.msra.mxu0 %v184
    %209 = vmatprep.subr.mxu0 0.0
    %210 = vmatpush1.msra.mxu0 %v185
    %211 = vmatprep.subr.mxu0 0.0
    %212 = vmatpush1.msra.mxu0 %v186
    %213 = vmatprep.subr.mxu0 0.0
    %214 = vmatpush1.msra.mxu0 %v187
    %215 = vmatprep.subr.mxu0 0.0
    %216 = vmatpush1.msra.mxu0 %v188
    %217 = vmatprep.subr.mxu0 0.0
    %218 = vmatpush1.msra.mxu0 %v189
    %219 = vmatprep.subr.mxu0 0.0
    %220 = vmatpush1.msra.mxu0 %v190
    %221 = vmatprep.subr.mxu0 0.0
    %222 = vmatpush1.msra.mxu0 %v191
    %223 = vmatprep.subr.mxu0 0.0
    %224 = vmatpush1.msra.mxu0 %v192
    %225 = vmatprep.subr.mxu0 0.0
    %226 = vmatpush1.msra.mxu0 %v193
    %227 = vmatprep.subr.mxu0 0.0
    %228 = vmatpush1.msra.mxu0 %v194
    %229 = vmatprep.subr.mxu0 0.0
    %230 = vmatpush1.msra.mxu0 %v195
    %231 = vmatprep.subr.mxu0 0.0
    %232 = vmatpush1.msra.mxu0 %v196
    %233 = vmatprep.subr.mxu0 0.0
    %234 = vmatpush1.msra.mxu0 %v197
    %235 = vmatprep.subr.mxu0 0.0
    %236 = vmatpush1.msra.mxu0 %v198
    %237 = vmatprep.subr.mxu0 0.0
    %238 = vmatpush1.msra.mxu0 %v199
    %239 = vmatprep.subr.mxu0 0.0
    %240 = vmatpush1.msra.mxu0 0.0
    %241 = vmatprep.subr.mxu0 0.0
    %242 = vmatpush1.msra.mxu0 0.0
    %243 = vmatprep.subr.mxu0 0.0
    %244 = vmatpush1.msra.mxu0 0.0
    %245 = vmatprep.subr.mxu0 0.0
    %246 = vmatpush1.msra.mxu0 0.0
    %247 = vmatprep.subr.mxu0 0.0
    %248 = vmatpush1.msra.mxu0 0.0
    %249 = vmatprep.subr.mxu0 0.0
    %250 = vmatpush1.msra.mxu0 0.0
    %251 = vmatprep.subr.mxu0 0.0
    %252 = vmatpush1.msra.mxu0 0.0
    %253 = vmatprep.subr.mxu0 0.0
    %254 = vmatpush1.msra.mxu0 0.0
    %255 = vmatprep.subr.mxu0 0.0
    %256 = vmatpush1.msra.mxu0 0.0
    %257 = vmatprep.subr.mxu0 0.0
    %258 = vmatpush1.msra.mxu0 0.0
    %259 = vmatprep.subr.mxu0 0.0
    %260 = vmatpush1.msra.mxu0 0.0
    %261 = vmatprep.subr.mxu0 0.0
    %262 = vmatpush1.msra.mxu0 0.0
    %263 = vmatprep.subr.mxu0 0.0
    %264 = vmatpush1.msra.mxu0 0.0
    %265 = vmatprep.subr.mxu0 0.0
    %266 = vmatpush1.msra.mxu0 0.0
    %267 = vmatprep.subr.mxu0 0.0
    %268 = vmatpush1.msra.mxu0 0.0
    %269 = vmatprep.subr.mxu0 0.0
    %270 = vmatpush1.msra.mxu0 0.0
    %271 = vmatprep.mubr.f32.mxu0 0.0
    %272 = vmatmul.mubr.f32.gmra.mrb[0].mxu0 %v183
    %v273 = vpop.f32.mrb[0].mxu0
    %v274 = vadd.f32 %v205, %v273
    %v275 = vpop.f32.mrb[0].mxu0
    %276 = vdwg.mxu0
    %277 = vst [vmem:[#allocation8] sm:$0xff] %v274
    // Predicated region
    $region42: #{tpu_custom_call.1} parent=1 // pred_check
      _
    $region43: #{tpu_custom_call.1} parent=1 // pred_check_branch
      %279 = sbr.rel (0) target = $region45
    $region44: #{tpu_custom_call.1} parent=1 // pred_region
      %s281 = ssub.s32 128, 128
      %282 = vsyncadd [#allocation4], %s281
      %s284 = sshll.u32 [#allocation8], 4
      %s285 = int_to_ptr.vmem [resolvable:$true] %s284
      %287 = dma.vmem_to_hbm [thread:$0]  %s285, 128, %s7, [#allocation4]
    $region45: #{tpu_custom_call.1} parent=1 // pred_fallthru
      _
    // Predicated region
    $region46: #{tpu_custom_call.1} parent=1 // pred_check
      _
    $region47: #{tpu_custom_call.1} parent=1 // pred_check_branch
      %289 = sbr.rel (0) target = $region49
    $region48: #{tpu_custom_call.1} parent=1 // pred_region
      %290 = dma.done [#allocation4], 128
    $region49: #{tpu_custom_call.1} parent=1 // pred_fallthru
      _
    %291 = vsyncpa [#allocation3], 1
    %292 = vsyncpa [#allocation6], 1
    %293 = vsyncpa [#allocation4], 1

</llo_original>
